<compile_context>
chip_gen: v7x
topology: tpu7x:2x2x1
jax: 0.10.0
libtpu: 0.0.40
codegen_flags: <defaults>
</compile_context>

<pallas_src>
import jax
import jax.numpy as jnp
from jax.experimental import pallas as pl
from jax.experimental.pallas import tpu as pltpu

_LAYOUT_UNIT = 8 * 128                  # minimal (sublane, lane) layout unit
_VMEM_BLOCK_BUDGET = 24 * 1024 * 1024   # 2*(N+1) double-buffered blocks must fit here
_VMEM_LIMIT_BYTES = 32 * 1024 * 1024    # scoped VMEM limit (fits v7x 64 MiB, v5e default too low)


def _sum_kernel(*refs):
    """refs = (in_ref_0, ..., in_ref_{n-1}, out_ref)."""
    in_refs, out_ref = refs[:-1], refs[-1]
    # Accumulate in f32 for (sub-32-bit) float inputs — free on the VPU, no
    # extra HBM traffic; integer dtypes accumulate natively.
    if jnp.issubdtype(out_ref.dtype, jnp.floating):
        acc_dtype = jnp.float32
    else:
        acc_dtype = out_ref.dtype
    acc = in_refs[0][...].astype(acc_dtype)
    for r in in_refs[1:]:
        acc = acc + r[...].astype(acc_dtype)
    out_ref[...] = acc.astype(out_ref.dtype)


def _plan(n_elems, n_inputs, dtype_size):
    """Choose (padded_elems, lanes, rows, tile_rows) for the 2D slab layout."""
    padded = ((n_elems + _LAYOUT_UNIT - 1) // _LAYOUT_UNIT) * _LAYOUT_UNIT
    # Widest lane count (multiple of 128) dividing the padded size; padded is a
    # multiple of 1024 so lanes >= 1024 -> lane-dense blocks, unmasked vst.
    lanes = 128
    for w in (4096, 2048, 1024, 512, 256):
        if padded % w == 0:
            lanes = w
            break
    rows = padded // lanes

    # Largest tile keeping 2*(N inputs + 1 output) double-buffered blocks in budget.
    bytes_per_row = lanes * dtype_size
    max_tile_rows = _VMEM_BLOCK_BUDGET // (2 * (n_inputs + 1) * bytes_per_row)
    max_tile_rows = max(8, (max_tile_rows // 8) * 8)
    tile_rows = min(rows, max_tile_rows)

    # Megacore (v7x): give sizeable inputs >= ~4 grid steps so both TensorCores
    # participate; negligible per-step overhead on 1-TC chips.
    if n_elems * dtype_size >= (4 << 20) and rows >= 32:
        quarter = -(-rows // 4)                 # cdiv(rows, 4)
        quarter = ((quarter + 7) // 8) * 8
        tile_rows = min(tile_rows, quarter)

    if tile_rows < rows:
        tile_rows = max(8, (tile_rows // 8) * 8)  # keep (8,128) block constraint
    return padded, lanes, rows, tile_rows


@jax.jit
def pallas_sum(*args):
    """Elementwise sum of N same-shaped arrays via a Pallas TPU kernel."""
    assert len(args) >= 1
    shape = args[0].shape
    dtype = args[0].dtype
    for a in args[1:]:
        assert a.shape == shape and a.dtype == dtype

    n_elems = 1
    for d in shape:
        n_elems *= d
    dtype_size = jnp.dtype(dtype).itemsize
    n_inputs = len(args)

    padded, lanes, rows, tile_rows = _plan(n_elems, n_inputs, dtype_size)

    slabs = []
    for a in args:
        f = a.reshape(-1)
        if padded != n_elems:
            # Only for unaligned sizes: pad by < 1024 elements (one layout unit).
            f = jnp.pad(f, (0, padded - n_elems))
        slabs.append(f.reshape(rows, lanes))

    grid = (pl.cdiv(rows, tile_rows),)
    spec = pl.BlockSpec((tile_rows, lanes), lambda i: (i, 0))

    cost = pl.CostEstimate(
        flops=max(n_inputs - 1, 0) * n_elems,
        transcendentals=0,
        bytes_accessed=(n_inputs + 1) * n_elems * dtype_size,
    )

    out2d = pl.pallas_call(
        _sum_kernel,
        out_shape=jax.ShapeDtypeStruct((rows, lanes), dtype),
        grid_spec=pltpu.PrefetchScalarGridSpec(
            num_scalar_prefetch=0,
            grid=grid,
            in_specs=[spec] * n_inputs,
            out_specs=spec,
        ),
        compiler_params=pltpu.CompilerParams(
            dimension_semantics=("parallel",),
            vmem_limit_bytes=_VMEM_LIMIT_BYTES,
        ),
        cost_estimate=cost,
    )(*slabs)

    out_flat = out2d.reshape(-1)
    if padded != n_elems:
        out_flat = out_flat[:n_elems]   # only pays a copy on unaligned shapes
    return out_flat.reshape(shape)


if __name__ == "__main__":
    key = jax.random.PRNGKey(0)
    k1, k2, k3 = jax.random.split(key, 3)
    shape = (2, 4, 16, 16)  # NCHW
    x1 = jax.random.normal(k1, shape, dtype=jnp.float32)
    x2 = jax.random.normal(k2, shape, dtype=jnp.float32)
    x3 = jax.random.normal(k3, shape, dtype=jnp.float32)

    out = pallas_sum(x1, x2, x3)
    out = jax.block_until_ready(out)

    ref = x1 + x2 + x3
    assert out.shape == shape and out.dtype == jnp.float32
    assert jnp.allclose(out, ref, atol=1e-6, rtol=1e-6)
    print("KERNEL_OK")
</pallas_src>

<mosaic_0001>
module attributes {stable_mosaic.version = 11 : i64} {
  func.func @_sum_kernel(%arg0: i32, %arg1: memref<1x2048xf32, #tpu.memory_space<vmem>>, %arg2: memref<1x2048xf32, #tpu.memory_space<vmem>>, %arg3: memref<1x2048xf32, #tpu.memory_space<vmem>>, %arg4: memref<1x2048xf32, #tpu.memory_space<vmem>>) attributes {dimension_semantics = [#tpu.dimension_semantics<parallel>], iteration_bounds = array<i64: 1>, scalar_prefetch = 0 : i64, scratch_operands = 0 : i64, tpu.core_type = #tpu.core_type<tc>, window_params = [{transform_indices = @transform_0, window_bounds = array<i64: 1, 2048>}, {transform_indices = @transform_1, window_bounds = array<i64: 1, 2048>}, {transform_indices = @transform_2, window_bounds = array<i64: 1, 2048>}, {transform_indices = @transform_3, window_bounds = array<i64: 1, 2048>}]} {
    %c0 = arith.constant 0 : index
    %c0_0 = arith.constant 0 : index
    %0 = vector.load %arg1[%c0, %c0_0] : memref<1x2048xf32, #tpu.memory_space<vmem>>, vector<1x2048xf32>
    %c0_1 = arith.constant 0 : index
    %c0_2 = arith.constant 0 : index
    %1 = vector.load %arg2[%c0_1, %c0_2] : memref<1x2048xf32, #tpu.memory_space<vmem>>, vector<1x2048xf32>
    %2 = arith.addf %0, %1 : vector<1x2048xf32>
    %c0_3 = arith.constant 0 : index
    %c0_4 = arith.constant 0 : index
    %3 = vector.load %arg3[%c0_3, %c0_4] : memref<1x2048xf32, #tpu.memory_space<vmem>>, vector<1x2048xf32>
    %4 = arith.addf %2, %3 : vector<1x2048xf32>
    %c0_5 = arith.constant 0 : index
    %c0_6 = arith.constant 0 : index
    %5 = vector.load %arg4[%c0_5, %c0_6] : memref<1x2048xf32, #tpu.memory_space<vmem>>, vector<1x2048xf32>
    tpu.vector_store %arg4[%c0_5, %c0_6], %4 {strides = array<i32>} : memref<1x2048xf32, #tpu.memory_space<vmem>>, vector<1x2048xf32>,
    return
  }
  func.func @transform_0(%arg0: i32) -> (i32, i32) {
    %c0_i32 = arith.constant 0 : i32
    %c0_i32_0 = arith.constant 0 : i32
    return %arg0, %c0_i32 : i32, i32
  }
  func.func @transform_1(%arg0: i32) -> (i32, i32) {
    %c0_i32 = arith.constant 0 : i32
    %c0_i32_0 = arith.constant 0 : i32
    return %arg0, %c0_i32 : i32, i32
  }
  func.func @transform_2(%arg0: i32) -> (i32, i32) {
    %c0_i32 = arith.constant 0 : i32
    %c0_i32_0 = arith.constant 0 : i32
    return %arg0, %c0_i32 : i32, i32
  }
  func.func @transform_3(%arg0: i32) -> (i32, i32) {
    %c0_i32 = arith.constant 0 : i32
    %c0_i32_0 = arith.constant 0 : i32
    return %arg0, %c0_i32 : i32, i32
  }
}

</mosaic_0001>

<llo_original>
// kernel: pallas_sum.1
$region0: #{pallas_sum.1}
  #allocation0 [shape = 'u32[]', space=smem, size = 0x4, offset = 0x4, fixed_abs, tag = 'smem constant byte address 0x4 - core index']
  #allocation1 [shape = 'u32[144,128]{1,0:T(1,128)}', space=vmem, size = 0x12000, scoped, tag = 'internal scratch']
  %s0 = inlined_call_operand.vmem [shape: f32[1,2048], index: 0, kind: input, shape index: {}]
  %s1 = inlined_call_operand.vmem [shape: f32[1,2048], index: 1, kind: input, shape index: {}]
  %s2 = inlined_call_operand.vmem [shape: f32[1,2048], index: 2, kind: input, shape index: {}]
  %s3 = inlined_call_operand.vmem [shape: f32[1,2048], index: 3, kind: output, shape index: {}]
  %s4 = sld [smem:[#allocation0]]
  $region22: #{pallas_sum.1} parent=0
    _
  %s6 = ssub.s32 1, %s4
  %s7 = scalar_select 0, %s6, %s4
  // Predicated region
  $region2: #{pallas_sum.1} parent=0 // pred_check
    _
  $region3: #{pallas_sum.1} parent=0 // pred_check_branch
    %9 = sbr.rel (0) target = $region5
  $region4: #{pallas_sum.1} parent=0 // pred_region
    _
  $region5: #{pallas_sum.1} parent=0 // pred_fallthru
    _
  // Predicated region
  $region6: #{pallas_sum.1} parent=0 // pred_check
    _
  $region7: #{pallas_sum.1} parent=0 // pred_check_branch
    %11 = sbr.rel (0) target = $region9
  $region8: #{pallas_sum.1} parent=0 // pred_region
    _
  $region9: #{pallas_sum.1} parent=0 // pred_fallthru
    _
  // Predicated region
  $region10: #{pallas_sum.1} parent=0 // pred_check
    _
  $region11: #{pallas_sum.1} parent=0 // pred_check_branch
    %13 = sbr.rel (0) target = $region13
  $region12: #{pallas_sum.1} parent=0 // pred_region
    _
  $region13: #{pallas_sum.1} parent=0 // pred_fallthru
    _
  %v14 = vld [vmem:[%s0] sm:$0xff]
  %v15 = vld [vmem:[%s0 + $0x8] sm:$0xff]
  %v16 = vld [vmem:[%s1] sm:$0xff]
  %v17 = vld [vmem:[%s1 + $0x8] sm:$0xff]
  %v18 = vadd.f32 %v14, %v16
  %v19 = vadd.f32 %v15, %v17
  %v20 = vld [vmem:[%s2] sm:$0xff]
  %v21 = vld [vmem:[%s2 + $0x8] sm:$0xff]
  %v22 = vadd.f32 %v18, %v20
  %v23 = vadd.f32 %v19, %v21
  %24 = vst [vmem:[%s3] sm:$0xff] %v22
  %25 = vst [vmem:[%s3 + $0x8] sm:$0xff] %v23
  // Predicated region
  $region14: #{pallas_sum.1} parent=0 // pred_check
    _
  $region15: #{pallas_sum.1} parent=0 // pred_check_branch
    %27 = sbr.rel (0) target = $region17
  $region16: #{pallas_sum.1} parent=0 // pred_region
    _
  $region17: #{pallas_sum.1} parent=0 // pred_fallthru
    _
  // Predicated region
  $region18: #{pallas_sum.1} parent=0 // pred_check
    _
  $region19: #{pallas_sum.1} parent=0 // pred_check_branch
    %29 = sbr.rel (0) target = $region21
  $region20: #{pallas_sum.1} parent=0 // pred_region
    _
  $region21: #{pallas_sum.1} parent=0 // pred_fallthru
    _

</llo_original>
